<compile_context>
chip_gen: v5e
topology: v5e:2x2
jax: 0.10.0
libtpu: 0.0.40
codegen_flags: <defaults>
</compile_context>

<pallas_src>
import jax
import jax.numpy as jnp
from jax.experimental import pallas as pl
from jax.experimental.pallas import tpu as pltpu

NUM_EMBEDDINGS = 50


def _pos_embed_kernel(col_ref, row_ref, out_ref):
    # col_ref: (1, W, F)  -- col_embed weights for indices [0, W)
    # row_ref: (H, 1, F)  -- row_embed weights for indices [0, H)
    # out_ref: (H, W, F)  -- one "part" block (part axis squeezed by BlockSpec)
    #   part 0 == x (col) half, part 1 == y (row) half.
    H, W, F = out_ref.shape
    part = pl.program_id(0)

    @pl.when(part == 0)
    def _():
        # x_emb.unsqueeze(0).repeat(h, 1, 1): broadcast the col table over H
        # (leading-dim replication; lane dim stays F -> dense stores).
        out_ref[...] = jnp.broadcast_to(col_ref[...], (H, W, F))

    @pl.when(part == 1)
    def _():
        # y_emb.unsqueeze(1).repeat(1, w, 1): broadcast the row table over W
        # (sublane broadcast; lane dim stays F -> dense stores).
        out_ref[...] = jnp.broadcast_to(row_ref[...], (H, W, F))


def position_embedding_learned(x, col_weight, row_weight):
    """Forward pass of PositionEmbeddingLearned.

    x:          (B, H, W) float32 (only its shape is used, like the PyTorch module)
    col_weight: (num_embeddings, F) float32
    row_weight: (num_embeddings, F) float32
    returns:    (B, 2F, H, W) float32
    """
    B = x.shape[0]
    H, W = x.shape[-2], x.shape[-1]
    F = col_weight.shape[1]

    # Embedding lookup with arange indices == leading slice (glue, not hot path).
    col3 = col_weight[:W][None, :, :]   # (1, W, F)
    row3 = row_weight[:H][:, None, :]   # (H, 1, F)

    # Batch-free, feature-minor output: (2, H, W, F).
    # NOTE: for very large feature maps on v7x (64 MiB VMEM), tile along H
    # (multiples of 8) and raise vmem_limit_bytes; unnecessary at these sizes.
    parts = pl.pallas_call(
        _pos_embed_kernel,
        out_shape=jax.ShapeDtypeStruct((2, H, W, F), jnp.float32),
        grid_spec=pltpu.PrefetchScalarGridSpec(
            num_scalar_prefetch=0,
            grid=(2,),
            in_specs=[
                pl.BlockSpec((1, W, F), lambda p: (0, 0, 0)),
                pl.BlockSpec((H, 1, F), lambda p: (0, 0, 0)),
            ],
            out_specs=pl.BlockSpec((None, H, W, F), lambda p: (p, 0, 0, 0)),
        ),
        compiler_params=pltpu.CompilerParams(
            dimension_semantics=("parallel",)
        ),
    )(col3, row3)

    # Layout plumbing back to PyTorch NCHW: (2, H, W, F) -> (2, F, H, W)
    # -> (2F, H, W); channels [0:F) = x/col half, [F:2F) = y/row half.
    pos = jnp.transpose(parts, (0, 3, 1, 2)).reshape(2 * F, H, W)
    # Batch replication happens outside the kernel (batch-invariant content).
    return jnp.broadcast_to(pos[None], (B, 2 * F, H, W))


def _reference(x, col_weight, row_weight):
    # Pure-JAX reference mirroring the PyTorch forward exactly.
    B = x.shape[0]
    H, W = x.shape[-2], x.shape[-1]
    x_emb = col_weight[jnp.arange(W)]                      # (W, F)
    y_emb = row_weight[jnp.arange(H)]                      # (H, F)
    x_rep = jnp.broadcast_to(x_emb[None, :, :], (H, W, x_emb.shape[-1]))
    y_rep = jnp.broadcast_to(y_emb[:, None, :], (H, W, y_emb.shape[-1]))
    pos = jnp.concatenate([x_rep, y_rep], axis=-1)         # (H, W, 2F)
    pos = jnp.transpose(pos, (2, 0, 1))[None]              # (1, 2F, H, W)
    return jnp.broadcast_to(pos, (B,) + pos.shape[1:])


if __name__ == "__main__":
    key = jax.random.PRNGKey(0)
    k_x, k_col, k_row = jax.random.split(key, 3)

    # Small shapes consistent with the module's forward: x of shape (B, H, W).
    B, H, W = 2, 15, 15
    num_pos_feats = 64  # -> output channels = 128

    x = jax.random.normal(k_x, (B, H, W), dtype=jnp.float32)
    # nn.init.uniform_ defaults to U[0, 1)
    col_weight = jax.random.uniform(k_col, (NUM_EMBEDDINGS, num_pos_feats), dtype=jnp.float32)
    row_weight = jax.random.uniform(k_row, (NUM_EMBEDDINGS, num_pos_feats), dtype=jnp.float32)

    out = position_embedding_learned(x, col_weight, row_weight)
    out = jax.block_until_ready(out)

    ref = _reference(x, col_weight, row_weight)
    assert out.shape == (B, 2 * num_pos_feats, H, W), out.shape
    assert out.dtype == jnp.float32
    assert bool(jnp.allclose(out, ref)), "mismatch vs reference"

    print("KERNEL_OK")
</pallas_src>

<mosaic_0001>
module attributes {stable_mosaic.version = 11 : i64} {
  func.func @_pos_embed_kernel(%arg0: i32, %arg1: memref<1x15x64xf32, #tpu.memory_space<vmem>>, %arg2: memref<15x1x64xf32, #tpu.memory_space<vmem>>, %arg3: memref<1x15x15x64xf32, #tpu.memory_space<vmem>>) attributes {dimension_semantics = [#tpu.dimension_semantics<parallel>], iteration_bounds = array<i64: 2>, scalar_prefetch = 0 : i64, scratch_operands = 0 : i64, tpu.core_type = #tpu.core_type<tc>, window_params = [{pipeline_mode = #tpu.pipeline_mode<synchronous>, transform_indices = @transform_0, window_bounds = array<i64: 1, 15, 64>}, {pipeline_mode = #tpu.pipeline_mode<synchronous>, transform_indices = @transform_1, window_bounds = array<i64: 15, 1, 64>}, {transform_indices = @transform_2, window_bounds = array<i64: 1, 15, 15, 64>}]} {
    %c0_i32 = arith.constant 0 : i32
    %0 = arith.cmpi eq, %arg0, %c0_i32 : i32
    %1 = arith.extui %0 : i1 to i32
    %c0_i32_0 = arith.constant 0 : i32
    %2 = arith.cmpi ne, %1, %c0_i32_0 : i32
    scf.if %2 {
      %c0 = arith.constant 0 : index
      %c0_2 = arith.constant 0 : index
      %c0_3 = arith.constant 0 : index
      %6 = vector.load %arg1[%c0, %c0_2, %c0_3] : memref<1x15x64xf32, #tpu.memory_space<vmem>>, vector<1x15x64xf32>
      %7 = vector.shape_cast %6 : vector<1x15x64xf32> to vector<1x15x64xf32>
      %8 = vector.broadcast %7 : vector<1x15x64xf32> to vector<15x15x64xf32>
      %c0_4 = arith.constant 0 : index
      %c0_5 = arith.constant 0 : index
      %c0_6 = arith.constant 0 : index
      %c0_7 = arith.constant 0 : index
      %9 = vector.load %arg3[%c0_4, %c0_5, %c0_6, %c0_7] : memref<1x15x15x64xf32, #tpu.memory_space<vmem>>, vector<1x15x15x64xf32>
      %10 = vector.shape_cast %9 : vector<1x15x15x64xf32> to vector<15x15x64xf32>
      %11 = vector.shape_cast %8 : vector<15x15x64xf32> to vector<1x15x15x64xf32>
      tpu.vector_store %arg3[%c0_4, %c0_5, %c0_6, %c0_7], %11 {strides = array<i32>} : memref<1x15x15x64xf32, #tpu.memory_space<vmem>>, vector<1x15x15x64xf32>,
    } else {
    }
    %c1_i32 = arith.constant 1 : i32
    %3 = arith.cmpi eq, %arg0, %c1_i32 : i32
    %4 = arith.extui %3 : i1 to i32
    %c0_i32_1 = arith.constant 0 : i32
    %5 = arith.cmpi ne, %4, %c0_i32_1 : i32
    scf.if %5 {
      %c0 = arith.constant 0 : index
      %c0_2 = arith.constant 0 : index
      %c0_3 = arith.constant 0 : index
      %6 = vector.load %arg2[%c0, %c0_2, %c0_3] : memref<15x1x64xf32, #tpu.memory_space<vmem>>, vector<15x1x64xf32>
      %7 = vector.shape_cast %6 : vector<15x1x64xf32> to vector<15x1x64xf32>
      %8 = vector.broadcast %7 : vector<15x1x64xf32> to vector<15x15x64xf32>
      %c0_4 = arith.constant 0 : index
      %c0_5 = arith.constant 0 : index
      %c0_6 = arith.constant 0 : index
      %c0_7 = arith.constant 0 : index
      %9 = vector.load %arg3[%c0_4, %c0_5, %c0_6, %c0_7] : memref<1x15x15x64xf32, #tpu.memory_space<vmem>>, vector<1x15x15x64xf32>
      %10 = vector.shape_cast %9 : vector<1x15x15x64xf32> to vector<15x15x64xf32>
      %11 = vector.shape_cast %8 : vector<15x15x64xf32> to vector<1x15x15x64xf32>
      tpu.vector_store %arg3[%c0_4, %c0_5, %c0_6, %c0_7], %11 {strides = array<i32>} : memref<1x15x15x64xf32, #tpu.memory_space<vmem>>, vector<1x15x15x64xf32>,
    } else {
    }
    return
  }
  func.func @transform_0(%arg0: i32) -> (i32, i32, i32) {
    %c0_i32 = arith.constant 0 : i32
    %c0_i32_0 = arith.constant 0 : i32
    %c0_i32_1 = arith.constant 0 : i32
    %c0_i32_2 = arith.constant 0 : i32
    return %c0_i32, %c0_i32_0, %c0_i32_1 : i32, i32, i32
  }
  func.func @transform_1(%arg0: i32) -> (i32, i32, i32) {
    %c0_i32 = arith.constant 0 : i32
    %c0_i32_0 = arith.constant 0 : i32
    %c0_i32_1 = arith.constant 0 : i32
    %c0_i32_2 = arith.constant 0 : i32
    return %c0_i32, %c0_i32_0, %c0_i32_1 : i32, i32, i32
  }
  func.func @transform_2(%arg0: i32) -> (i32, i32, i32, i32) {
    %c0_i32 = arith.constant 0 : i32
    %c0_i32_0 = arith.constant 0 : i32
    %c0_i32_1 = arith.constant 0 : i32
    %c0_i32_2 = arith.constant 0 : i32
    return %arg0, %c0_i32, %c0_i32_0, %c0_i32_1 : i32, i32, i32, i32
  }
}

</mosaic_0001>

<llo_original>
// kernel: tpu_custom_call.1
$region0: #{tpu_custom_call.1}
  #allocation0 [shape = 'u32[]', space=smem, size = 0x4, offset = 0x4, fixed_abs, tag = 'smem constant byte address 0x4 - core index']
  #allocation1 [shape = 'u32[72,128]{1,0:T(1,128)}', space=vmem, size = 0x9000, scoped, tag = 'internal scratch']
  %s0 = inlined_call_operand.vmem [shape: f32[1,15,64], index: 0, kind: input, shape index: {}]
  %s1 = inlined_call_operand.vmem [shape: f32[15,1,64], index: 1, kind: input, shape index: {}]
  %s2 = inlined_call_operand.vmem [shape: f32[2,15,15,64], index: 2, kind: output, shape index: {}]
  %s3 = sld [smem:[#allocation0]]
  $region49: #{tpu_custom_call.1} parent=0
    _
  %s5 = ssub.s32 1, %s3
  %s6 = scalar_select 0, %s5, %s3
  loop: start=0, step=1, limit=4
  $region2: #{tpu_custom_call.1} parent=0 // loop_pre_header
    _
  $region3: #{tpu_custom_call.1} parent=0 // loop_header
    %s8 = sphi 0, %s12
    %p9 = scmp.ge.s32.totalorder %s8, 4
    %s16 = sphi 0, %s16
    %s18 = sphi 0, %s16
    %s19 = sphi 0, %s18
    %s33 = sphi 0, %s19
    %s37 = sphi 0, %s37
    %s39 = sphi 0, %s37
    %s40 = sphi 0, %s39
    %s54 = sphi 0, %s40
    %s60 = sphi 0, %s62
    %s63 = sphi 0, %s60
    %s64 = sphi 0, %s63
    %s80 = sphi 0, %s64
  $region4: #{tpu_custom_call.1} parent=0 // loop_header_branch
    %11 = sbr.rel (%p9) target = $region8
  $region5: #{tpu_custom_call.1} parent=0 // loop_body
    %s13 = ssub.s32 %s8, 1
    %s14 = ssub.s32 %s8, 2
    %s15 = sadd.s32 %s8, 1
    %s17 = sadd.s32 %s16, 1
    %p20 = scmp.eq.s32.totalorder %s8, 1
    %p21 = scmp.ne.s32.totalorder %s16, %s18
    %p22 = scmp.eq.s32.totalorder %s8, 0
    %p23 = por %p21, %p22
    %p24 = scmp.ne.s32.totalorder %s16, %s18
    %p25 = scmp.eq.s32.totalorder %s13, 1
    %p26 = por %p24, %p25
    %p27 = scmp.ne.s32.totalorder %s18, %s19
    %p28 = scmp.eq.s32.totalorder %s13, 0
    %p29 = por %p27, %p28
    %p30 = scmp.ne.s32.totalorder %s18, %s19
    %p31 = scmp.eq.s32.totalorder %s14, 1
    %p32 = por %p30, %p31
    %p34 = scmp.ne.s32.totalorder %s19, %s33
    %p35 = scmp.eq.s32.totalorder %s14, 0
    %p36 = por %p34, %p35
    %s38 = sadd.s32 %s37, 1
    %p41 = scmp.eq.s32.totalorder %s8, 1
    %p42 = scmp.ne.s32.totalorder %s37, %s39
    %p43 = scmp.eq.s32.totalorder %s8, 0
    %p44 = por %p42, %p43
    %p45 = scmp.ne.s32.totalorder %s37, %s39
    %p46 = scmp.eq.s32.totalorder %s13, 1
    %p47 = por %p45, %p46
    %p48 = scmp.ne.s32.totalorder %s39, %s40
    %p49 = scmp.eq.s32.totalorder %s13, 0
    %p50 = por %p48, %p49
    %p51 = scmp.ne.s32.totalorder %s39, %s40
    %p52 = scmp.eq.s32.totalorder %s14, 1
    %p53 = por %p51, %p52
    %p55 = scmp.ne.s32.totalorder %s40, %s54
    %p56 = scmp.eq.s32.totalorder %s14, 0
    %p57 = por %p55, %p56
    %s58 = ssub.s32 %s8, %s15
    %p59 = scmp.eq.s32.totalorder %s58, 0
    %s61 = sadd.s32 %s60, 1
    %s62 = scalar_select %p59, %s60, %s61
    %p65 = pneg %p59
    %p66 = scmp.eq.s32.totalorder %s8, 1
    %p67 = por %p65, %p66
    %p68 = scmp.ne.s32.totalorder %s60, %s63
    %p69 = scmp.eq.s32.totalorder %s8, 0
    %p70 = por %p68, %p69
    %p71 = scmp.ne.s32.totalorder %s60, %s63
    %p72 = scmp.eq.s32.totalorder %s13, 1
    %p73 = por %p71, %p72
    %p74 = scmp.ne.s32.totalorder %s63, %s64
    %p75 = scmp.eq.s32.totalorder %s13, 0
    %p76 = por %p74, %p75
    %p77 = scmp.ne.s32.totalorder %s63, %s64
    %p78 = scmp.eq.s32.totalorder %s14, 1
    %p79 = por %p77, %p78
    %p81 = scmp.ne.s32.totalorder %s64, %s80
    %p82 = scmp.eq.s32.totalorder %s14, 0
    %p83 = por %p81, %p82
    %p84 = scmp.le.s32.totalorder 1, %s8
    %p85 = scmp.lt.s32.totalorder %s8, 3
    %p86 = pnand %p84, %p85
    %p87 = pneg %p86
    // Predicated region
    $region9: #{tpu_custom_call.1} parent=5 // pred_check
      _
    $region10: #{tpu_custom_call.1} parent=5 // pred_check_branch
      %89 = sbr.rel (%p86) target = $region12
    $region11: #{tpu_custom_call.1} parent=5 // pred_region
      %s90 = ssub.s32 %s8, 1
      // Predicated region
      $region13: #{tpu_custom_call.1} parent=11 // pred_check
        %p91 = pneg %p29
      $region14: #{tpu_custom_call.1} parent=11 // pred_check_branch
        %93 = sbr.rel (%p91) target = $region16
      $region15: #{tpu_custom_call.1} parent=11 // pred_region
        _
      $region16: #{tpu_custom_call.1} parent=11 // pred_fallthru
        _
      // Predicated region
      $region17: #{tpu_custom_call.1} parent=11 // pred_check
        %p94 = pneg %p50
      $region18: #{tpu_custom_call.1} parent=11 // pred_check_branch
        %96 = sbr.rel (%p94) target = $region20
      $region19: #{tpu_custom_call.1} parent=11 // pred_region
        _
      $region20: #{tpu_custom_call.1} parent=11 // pred_fallthru
        _
    $region12: #{tpu_custom_call.1} parent=5 // pred_fallthru
      _
    %p97 = scmp.lt.s32.totalorder %s8, 2
    // Predicated region
    $region21: #{tpu_custom_call.1} parent=5 // pred_check
      %p98 = pneg %p97
    $region22: #{tpu_custom_call.1} parent=5 // pred_check_branch
      %100 = sbr.rel (%p98) target = $region24
    $region23: #{tpu_custom_call.1} parent=5 // pred_region
      _
    $region24: #{tpu_custom_call.1} parent=5 // pred_fallthru
      _
    %p101 = scmp.le.s32.totalorder 1, %s8
    %p102 = scmp.lt.s32.totalorder %s8, 3
    %p103 = pnand %p101, %p102
    %p104 = pneg %p103
    // Predicated region
    $region25: #{tpu_custom_call.1} parent=5 // pred_check
      _
    $region26: #{tpu_custom_call.1} parent=5 // pred_check_branch
      %106 = sbr.rel (%p103) target = $region28
    $region27: #{tpu_custom_call.1} parent=5 // pred_region
      %s107 = ssub.s32 %s8, 1
      %p108 = pneg %p29
      %p109 = pneg %p26
      %p110 = pneg %p50
      %p111 = pneg %p47
      %p112 = pneg %p76
      %p113 = pneg %p73
      %p114 = scmp.lt.s32.totalorder %s13, 1
      %s115 = scalar_select %p114, %s13, 1
      %s116 = smul.addr %s115, 30
      %s117 = smul.addr %s116, 8
      %s118 = scalar_lea.vmem %s2, %s117
      %p119 = scmp.lt.s32.totalorder %s13, 1
      %s120 = scalar_select %p119, %s13, 1
      %s121 = smul.addr %s120, 30
      %s122 = smul.addr %s121, 8
      %s123 = scalar_lea.vmem %s2, %s122
      %p124 = scmp.eq.s32.totalorder %s13, 0
      // Predicated region
      $region29: #{tpu_custom_call.1} parent=27 // pred_check
        %p125 = pneg %p124
      $region30: #{tpu_custom_call.1} parent=27 // pred_check_branch
        %127 = sbr.rel (%p125) target = $region32
      $region31: #{tpu_custom_call.1} parent=27 // pred_region
        %v128 = vld [vmem:[%s0] sm:$0xff]
        %v129 = vld [vmem:[%s0 + $0x8] sm:$0x7f]
        %vm130 = vcmask 523264
        %131 = vst.msk [vmem:[%s123] sm:$0xff] %vm130, %v128
        %vm132 = vcmask 522240
        %133 = vst.msk [vmem:[%s123 + $0x8] sm:$0x7f] %vm132, %v129
        %134 = vst.msk [vmem:[%s123 + $0x10] sm:$0xff] %vm130, %v128
        %135 = vst.msk [vmem:[%s123 + $0x18] sm:$0x7f] %vm132, %v129
        %136 = vst.msk [vmem:[%s123 + $0x20] sm:$0xff] %vm130, %v128
        %137 = vst.msk [vmem:[%s123 + $0x28] sm:$0x7f] %vm132, %v129
        %138 = vst.msk [vmem:[%s123 + $0x30] sm:$0xff] %vm130, %v128
        %139 = vst.msk [vmem:[%s123 + $0x38] sm:$0x7f] %vm132, %v129
        %140 = vst.msk [vmem:[%s123 + $0x40] sm:$0xff] %vm130, %v128
        %141 = vst.msk [vmem:[%s123 + $0x48] sm:$0x7f] %vm132, %v129
        %142 = vst.msk [vmem:[%s123 + $0x50] sm:$0xff] %vm130, %v128
        %143 = vst.msk [vmem:[%s123 + $0x58] sm:$0x7f] %vm132, %v129
        %144 = vst.msk [vmem:[%s123 + $0x60] sm:$0xff] %vm130, %v128
        %145 = vst.msk [vmem:[%s123 + $0x68] sm:$0x7f] %vm132, %v129
        %146 = vst.msk [vmem:[%s123 + $0x70] sm:$0xff] %vm130, %v128
        %147 = vst.msk [vmem:[%s123 + $0x78] sm:$0x7f] %vm132, %v129
        %148 = vst.msk [vmem:[%s123 + $0x80] sm:$0xff] %vm130, %v128
        %149 = vst.msk [vmem:[%s123 + $0x88] sm:$0x7f] %vm132, %v129
        %150 = vst.msk [vmem:[%s123 + $0x90] sm:$0xff] %vm130, %v128
        %151 = vst.msk [vmem:[%s123 + $0x98] sm:$0x7f] %vm132, %v129
        %152 = vst.msk [vmem:[%s123 + $0xa0] sm:$0xff] %vm130, %v128
        %153 = vst.msk [vmem:[%s123 + $0xa8] sm:$0x7f] %vm132, %v129
        %154 = vst.msk [vmem:[%s123 + $0xb0] sm:$0xff] %vm130, %v128
        %155 = vst.msk [vmem:[%s123 + $0xb8] sm:$0x7f] %vm132, %v129
        %156 = vst.msk [vmem:[%s123 + $0xc0] sm:$0xff] %vm130, %v128
        %157 = vst.msk [vmem:[%s123 + $0xc8] sm:$0x7f] %vm132, %v129
        %158 = vst.msk [vmem:[%s123 + $0xd0] sm:$0xff] %vm130, %v128
        %159 = vst.msk [vmem:[%s123 + $0xd8] sm:$0x7f] %vm132, %v129
        %160 = vst.msk [vmem:[%s123 + $0xe0] sm:$0xff] %vm130, %v128
        %161 = vst.msk [vmem:[%s123 + $0xe8] sm:$0x7f] %vm132, %v129
      $region32: #{tpu_custom_call.1} parent=27 // pred_fallthru
        _
      %p162 = scmp.eq.s32.totalorder %s13, 1
      // Predicated region
      $region33: #{tpu_custom_call.1} parent=27 // pred_check
        %p163 = pneg %p162
      $region34: #{tpu_custom_call.1} parent=27 // pred_check_branch
        %165 = sbr.rel (%p163) target = $region36
      $region35: #{tpu_custom_call.1} parent=27 // pred_region
        %v166 = vld [vmem:[%s1] sm:$0x1]
        %v167 = vld [vmem:[%s1 + $0x1] sm:$0x1]
        %v168 = vld [vmem:[%s1 + $0x2] sm:$0x1]
        %v169 = vld [vmem:[%s1 + $0x3] sm:$0x1]
        %v170 = vld [vmem:[%s1 + $0x4] sm:$0x1]
        %v171 = vld [vmem:[%s1 + $0x5] sm:$0x1]
        %v172 = vld [vmem:[%s1 + $0x6] sm:$0x1]
        %v173 = vld [vmem:[%s1 + $0x7] sm:$0x1]
        %v174 = vld [vmem:[%s1 + $0x8] sm:$0x1]
        %v175 = vld [vmem:[%s1 + $0x9] sm:$0x1]
        %v176 = vld [vmem:[%s1 + $0xa] sm:$0x1]
        %v177 = vld [vmem:[%s1 + $0xb] sm:$0x1]
        %v178 = vld [vmem:[%s1 + $0xc] sm:$0x1]
        %v179 = vld [vmem:[%s1 + $0xd] sm:$0x1]
        %v180 = vld [vmem:[%s1 + $0xe] sm:$0x1]
        %v196 = vperm.slane %v166, 0
        %v197 = vperm.slane %v167, 0
        %v198 = vperm.slane %v168, 0
        %v199 = vperm.slane %v169, 0
        %v200 = vperm.slane %v170, 0
        %v201 = vperm.slane %v171, 0
        %v202 = vperm.slane %v172, 0
        %v203 = vperm.slane %v173, 0
        %v204 = vperm.slane %v174, 0
        %v205 = vperm.slane %v175, 0
        %v206 = vperm.slane %v176, 0
        %v207 = vperm.slane %v177, 0
        %v208 = vperm.slane %v178, 0
        %v209 = vperm.slane %v179, 0
        %v210 = vperm.slane %v180, 0
        %vm226 = vcmask 523264
        %227 = vst.msk [vmem:[%s123] sm:$0xff] %vm226, %v196
        %vm228 = vcmask 522240
        %229 = vst.msk [vmem:[%s123 + $0x8] sm:$0x7f] %vm228, %v196
        %230 = vst.msk [vmem:[%s123 + $0x10] sm:$0xff] %vm226, %v197
        %231 = vst.msk [vmem:[%s123 + $0x18] sm:$0x7f] %vm228, %v197
        %232 = vst.msk [vmem:[%s123 + $0x20] sm:$0xff] %vm226, %v198
        %233 = vst.msk [vmem:[%s123 + $0x28] sm:$0x7f] %vm228, %v198
        %234 = vst.msk [vmem:[%s123 + $0x30] sm:$0xff] %vm226, %v199
        %235 = vst.msk [vmem:[%s123 + $0x38] sm:$0x7f] %vm228, %v199
        %236 = vst.msk [vmem:[%s123 + $0x40] sm:$0xff] %vm226, %v200
        %237 = vst.msk [vmem:[%s123 + $0x48] sm:$0x7f] %vm228, %v200
        %238 = vst.msk [vmem:[%s123 + $0x50] sm:$0xff] %vm226, %v201
        %239 = vst.msk [vmem:[%s123 + $0x58] sm:$0x7f] %vm228, %v201
        %240 = vst.msk [vmem:[%s123 + $0x60] sm:$0xff] %vm226, %v202
        %241 = vst.msk [vmem:[%s123 + $0x68] sm:$0x7f] %vm228, %v202
        %242 = vst.msk [vmem:[%s123 + $0x70] sm:$0xff] %vm226, %v203
        %243 = vst.msk [vmem:[%s123 + $0x78] sm:$0x7f] %vm228, %v203
        %244 = vst.msk [vmem:[%s123 + $0x80] sm:$0xff] %vm226, %v204
        %245 = vst.msk [vmem:[%s123 + $0x88] sm:$0x7f] %vm228, %v204
        %246 = vst.msk [vmem:[%s123 + $0x90] sm:$0xff] %vm226, %v205
        %247 = vst.msk [vmem:[%s123 + $0x98] sm:$0x7f] %vm228, %v205
        %248 = vst.msk [vmem:[%s123 + $0xa0] sm:$0xff] %vm226, %v206
        %249 = vst.msk [vmem:[%s123 + $0xa8] sm:$0x7f] %vm228, %v206
        %250 = vst.msk [vmem:[%s123 + $0xb0] sm:$0xff] %vm226, %v207
        %251 = vst.msk [vmem:[%s123 + $0xb8] sm:$0x7f] %vm228, %v207
        %252 = vst.msk [vmem:[%s123 + $0xc0] sm:$0xff] %vm226, %v208
        %253 = vst.msk [vmem:[%s123 + $0xc8] sm:$0x7f] %vm228, %v208
        %254 = vst.msk [vmem:[%s123 + $0xd0] sm:$0xff] %vm226, %v209
        %255 = vst.msk [vmem:[%s123 + $0xd8] sm:$0x7f] %vm228, %v209
        %256 = vst.msk [vmem:[%s123 + $0xe0] sm:$0xff] %vm226, %v210
        %257 = vst.msk [vmem:[%s123 + $0xe8] sm:$0x7f] %vm228, %v210
      $region36: #{tpu_custom_call.1} parent=27 // pred_fallthru
        _
      %p258 = scmp.lt.s32.totalorder %s13, 1
      %s259 = scalar_select %p258, %s13, 1
      %s260 = smul.addr %s259, 30
      %s261 = smul.addr %s260, 8
      %s262 = scalar_lea.vmem %s2, %s261
      // Predicated region
      $region37: #{tpu_custom_call.1} parent=27 // pred_check
        %p263 = pneg %p73
      $region38: #{tpu_custom_call.1} parent=27 // pred_check_branch
        %265 = sbr.rel (%p263) target = $region40
      $region39: #{tpu_custom_call.1} parent=27 // pred_region
        _
      $region40: #{tpu_custom_call.1} parent=27 // pred_fallthru
        _
    $region28: #{tpu_custom_call.1} parent=5 // pred_fallthru
      _
    %p266 = scmp.le.s32.totalorder 2, %s8
    // Predicated region
    $region41: #{tpu_custom_call.1} parent=5 // pred_check
      %p267 = pneg %p266
    $region42: #{tpu_custom_call.1} parent=5 // pred_check_branch
      %269 = sbr.rel (%p267) target = $region44
    $region43: #{tpu_custom_call.1} parent=5 // pred_region
      %s270 = ssub.s32 %s8, 2
      // Predicated region
      $region45: #{tpu_custom_call.1} parent=43 // pred_check
        %p271 = pneg %p79
      $region46: #{tpu_custom_call.1} parent=43 // pred_check_branch
        %273 = sbr.rel (%p271) target = $region48
      $region47: #{tpu_custom_call.1} parent=43 // pred_region
        %p274 = scmp.lt.s32.totalorder %s14, 1
        %s275 = scalar_select %p274, %s14, 1
        %s276 = smul.addr %s275, 30
        %s277 = smul.addr %s276, 8
        %s278 = scalar_lea.vmem %s2, %s277
      $region48: #{tpu_custom_call.1} parent=43 // pred_fallthru
        _
    $region44: #{tpu_custom_call.1} parent=5 // pred_fallthru
      _
  $region6: #{tpu_custom_call.1} parent=0 // loop_footer
    %s12 = sadd.s32 1, %s8
  $region7: #{tpu_custom_call.1} parent=0 // loop_footer_branch
    %7 = sbr.rel target = $region3
  $region8: #{tpu_custom_call.1} parent=0 // loop_exit
    _

</llo_original>
